<compile_context>
chip_gen: v5e
topology: v5e:2x2
jax: 0.10.0
libtpu: 0.0.40
codegen_flags: <defaults>
</compile_context>

<pallas_src>
import functools

import jax
import jax.numpy as jnp
from jax.experimental import pallas as pl
from jax.experimental.pallas import tpu as pltpu

HIDDEN = 128        # hidden_dim of the PyTorch module
LANE = 128          # TPU lane width (batch-tile alignment)
NEG_SLOPE = 0.2     # LeakyReLU negative slope
TILE_N_MAX = 8192   # max batch tile (columns per grid step)


def _leaky_relu(h):
    # Valid because slope < 1: max(h, 0.2*h) == leaky_relu(h).
    return jnp.maximum(h, NEG_SLOPE * h)


def _mlp_kernel(xt_ref, w1t_ref, b1_ref, w2t_ref, b2_ref, w3_ref, b3_ref, o_ref):
    """Feature-major MLP tile.

    xt_ref : (2, T)   input points, batch along lanes
    w1t_ref: (H, 2)   first-layer weight, transposed
    b1_ref : (H, 1)
    w2t_ref: (H, H)   second-layer weight, transposed
    b2_ref : (H, 1)
    w3_ref : (H, 1)   third-layer weight column
    b3_ref : (1, 1)
    o_ref  : (1, T)   lane-dense output row
    """
    x0 = xt_ref[0:1, :]                                   # (1, T)
    x1 = xt_ref[1:2, :]                                   # (1, T)

    # Layer 1 (K=2): VPU broadcast FMAs, no MXU / no lane padding of the input.
    h = w1t_ref[:, 0:1] * x0 + w1t_ref[:, 1:2] * x1 + b1_ref[...]        # (H, T)
    h = _leaky_relu(h)

    # Layer 2: dense HxH on the MXU (f32 accumulate).
    h = jnp.dot(w2t_ref[...], h, preferred_element_type=jnp.float32) + b2_ref[...]
    h = _leaky_relu(h)

    # Layer 3: off the MXU — VPU multiply + sublane reduction to a single row.
    o_ref[...] = jnp.sum(h * w3_ref[...], axis=0, keepdims=True) + b3_ref[...]


def _round_up(v, m):
    return ((v + m - 1) // m) * m


def _tensorcores_per_chip():
    """Best-effort TensorCore-per-chip count (v7x has 2, v5e/v6e have 1)."""
    try:
        kind = jax.devices()[0].device_kind.lower()
    except Exception:
        return 1
    return 2 if ("v7" in kind or "7x" in kind) else 1


def _pick_tile_n(n, num_tc):
    """Batch tile (columns per grid step).

    2-TC chips (v7x): force >= 2 tiles once there is enough work so the
    ("parallel",) grid axis can shard across both cores.  Single-TC chips:
    one large tile whenever the batch fits (no per-step overhead doubling).
    """
    if num_tc >= 2 and n > 2 * LANE:
        return min(TILE_N_MAX, _round_up(pl.cdiv(n, 2), LANE))
    if n <= TILE_N_MAX:
        return n          # single full-array tile: no padding / ragged edge at all
    return TILE_N_MAX


def _forward(x, params, tile_n):
    w1, b1, w2, b2, w3, b3 = params
    n = x.shape[0]
    hidden = w1.shape[1]
    num_tiles = pl.cdiv(n, tile_n)

    # Cheap layout plumbing: tiny [N,2] -> [2,N] transpose (8 bytes/sample).
    # No batch padding: ragged last block is handled (masked) by Pallas.
    xt = x.astype(jnp.float32).T                                         # (2, n)

    w1t = w1.T                                                           # (H, 2)
    b1c = b1.reshape(hidden, 1)
    w2t = w2.T                                                           # (H, H)
    b2c = b2.reshape(hidden, 1)
    w3c = w3.reshape(hidden, 1)                                          # (H, 1)
    b3c = b3.reshape(1, 1)

    out = pl.pallas_call(
        _mlp_kernel,
        out_shape=jax.ShapeDtypeStruct((1, n), jnp.float32),
        grid_spec=pltpu.PrefetchScalarGridSpec(
            num_scalar_prefetch=0,
            grid=(num_tiles,),
            in_specs=[
                pl.BlockSpec((2, tile_n), lambda i: (0, i)),         # x (transposed)
                pl.BlockSpec((hidden, 2), lambda i: (0, 0)),         # w1^T
                pl.BlockSpec((hidden, 1), lambda i: (0, 0)),         # b1
                pl.BlockSpec((hidden, hidden), lambda i: (0, 0)),    # w2^T
                pl.BlockSpec((hidden, 1), lambda i: (0, 0)),         # b2
                pl.BlockSpec((hidden, 1), lambda i: (0, 0)),         # w3 column
                pl.BlockSpec((1, 1), lambda i: (0, 0)),              # b3
            ],
            out_specs=pl.BlockSpec((1, tile_n), lambda i: (0, i)),   # lane-dense row
        ),
        compiler_params=pltpu.CompilerParams(
            dimension_semantics=("parallel",),
            vmem_limit_bytes=48 * 1024 * 1024,
        ),
    )(xt, w1t, b1c, w2t, b2c, w3c, b3c)

    return out.reshape(n, 1)


@functools.partial(jax.jit, static_argnames=("tile_n_override",))
def discriminator_forward(x, params, tile_n_override=None):
    """x: [N, 2] float32 -> [N, 1] float32."""
    n = x.shape[0]
    tile_n = tile_n_override or _pick_tile_n(n, _tensorcores_per_chip())
    return _forward(x, params, tile_n)


def init_params(key, hidden_dim=HIDDEN):
    """Deterministic init mimicking nn.Linear default (uniform +/- 1/sqrt(fan_in))."""
    ks = jax.random.split(key, 6)

    def lin(kw, kb, fan_in, fan_out):
        bound = 1.0 / jnp.sqrt(fan_in)
        w = jax.random.uniform(kw, (fan_in, fan_out), jnp.float32, -bound, bound)
        b = jax.random.uniform(kb, (fan_out,), jnp.float32, -bound, bound)
        return w, b

    w1, b1 = lin(ks[0], ks[1], 2, hidden_dim)
    w2, b2 = lin(ks[2], ks[3], hidden_dim, hidden_dim)
    w3, b3 = lin(ks[4], ks[5], hidden_dim, 1)
    return (w1, b1, w2, b2, w3, b3)


def _reference_forward(x, params):
    w1, b1, w2, b2, w3, b3 = params
    with jax.default_matmul_precision("float32"):
        h = x @ w1 + b1
        h = jnp.maximum(h, NEG_SLOPE * h)
        h = h @ w2 + b2
        h = jnp.maximum(h, NEG_SLOPE * h)
        return h @ w3 + b3


def _check(out, ref, name):
    assert out.shape == ref.shape, (name, out.shape, ref.shape)
    err = float(jnp.max(jnp.abs(out - ref)))
    assert jnp.allclose(out, ref, atol=2e-3, rtol=2e-3), (name, err)


if __name__ == "__main__":
    key = jax.random.PRNGKey(0)
    k_param, k_x1, k_x2 = jax.random.split(key, 3)

    params = init_params(k_param)

    # Small batch of 2-D points (single-tile path).
    x_small = jax.random.normal(k_x1, (64, 2), jnp.float32)
    out_small = jax.block_until_ready(discriminator_forward(x_small, params))
    _check(out_small, _reference_forward(x_small, params), "small")

    # Ragged batch with the chip-dependent default tiling.
    x_multi = jax.random.normal(k_x2, (300, 2), jnp.float32)
    out_multi = jax.block_until_ready(discriminator_forward(x_multi, params))
    _check(out_multi, _reference_forward(x_multi, params), "ragged")

    # Force a small tile so the multi-tile grid + ragged (masked) last block
    # path is exercised on every TPU generation.
    out_forced = jax.block_until_ready(
        discriminator_forward(x_multi, params, tile_n_override=128))
    _check(out_forced, _reference_forward(x_multi, params), "forced_multi_tile")

    print("KERNEL_OK")
</pallas_src>

<mosaic_0001>
module attributes {stable_mosaic.version = 11 : i64} {
  func.func @_mlp_kernel(%arg0: i32, %arg1: memref<2x64xf32, #tpu.memory_space<vmem>>, %arg2: memref<128x2xf32, #tpu.memory_space<vmem>>, %arg3: memref<128x1xf32, #tpu.memory_space<vmem>>, %arg4: memref<128x128xf32, #tpu.memory_space<vmem>>, %arg5: memref<128x1xf32, #tpu.memory_space<vmem>>, %arg6: memref<128x1xf32, #tpu.memory_space<vmem>>, %arg7: memref<1x1xf32, #tpu.memory_space<vmem>>, %arg8: memref<1x64xf32, #tpu.memory_space<vmem>>) attributes {dimension_semantics = [#tpu.dimension_semantics<parallel>], iteration_bounds = array<i64: 1>, scalar_prefetch = 0 : i64, scratch_operands = 0 : i64, tpu.core_type = #tpu.core_type<tc>, window_params = [{transform_indices = @transform_0, window_bounds = array<i64: 2, 64>}, {pipeline_mode = #tpu.pipeline_mode<synchronous>, transform_indices = @transform_1, window_bounds = array<i64: 128, 2>}, {pipeline_mode = #tpu.pipeline_mode<synchronous>, transform_indices = @transform_2, window_bounds = array<i64: 128, 1>}, {pipeline_mode = #tpu.pipeline_mode<synchronous>, transform_indices = @transform_3, window_bounds = array<i64: 128, 128>}, {pipeline_mode = #tpu.pipeline_mode<synchronous>, transform_indices = @transform_4, window_bounds = array<i64: 128, 1>}, {pipeline_mode = #tpu.pipeline_mode<synchronous>, transform_indices = @transform_5, window_bounds = array<i64: 128, 1>}, {pipeline_mode = #tpu.pipeline_mode<synchronous>, transform_indices = @transform_6, window_bounds = array<i64: 1, 1>}, {transform_indices = @transform_7, window_bounds = array<i64: 1, 64>}]} {
    %c0 = arith.constant 0 : index
    %c0_0 = arith.constant 0 : index
    %0 = vector.load %arg1[%c0, %c0_0] : memref<2x64xf32, #tpu.memory_space<vmem>>, vector<1x64xf32>
    %c1 = arith.constant 1 : index
    %c0_1 = arith.constant 0 : index
    %1 = vector.load %arg1[%c1, %c0_1] : memref<2x64xf32, #tpu.memory_space<vmem>>, vector<1x64xf32>
    %c0_2 = arith.constant 0 : index
    %c0_3 = arith.constant 0 : index
    %2 = vector.load %arg2[%c0_2, %c0_3] : memref<128x2xf32, #tpu.memory_space<vmem>>, vector<128x1xf32>
    %3 = vector.broadcast %2 : vector<128x1xf32> to vector<128x64xf32>
    %4 = vector.broadcast %0 : vector<1x64xf32> to vector<128x64xf32>
    %5 = arith.mulf %3, %4 : vector<128x64xf32>
    %c0_4 = arith.constant 0 : index
    %c1_5 = arith.constant 1 : index
    %6 = vector.load %arg2[%c0_4, %c1_5] : memref<128x2xf32, #tpu.memory_space<vmem>>, vector<128x1xf32>
    %7 = vector.broadcast %6 : vector<128x1xf32> to vector<128x64xf32>
    %8 = vector.broadcast %1 : vector<1x64xf32> to vector<128x64xf32>
    %9 = arith.mulf %7, %8 : vector<128x64xf32>
    %10 = arith.addf %5, %9 : vector<128x64xf32>
    %c0_6 = arith.constant 0 : index
    %c0_7 = arith.constant 0 : index
    %11 = vector.load %arg3[%c0_6, %c0_7] : memref<128x1xf32, #tpu.memory_space<vmem>>, vector<128x1xf32>
    %12 = vector.broadcast %11 : vector<128x1xf32> to vector<128x64xf32>
    %13 = arith.addf %10, %12 : vector<128x64xf32>
    %cst = arith.constant 2.000000e-01 : f32
    %14 = vector.broadcast %cst : f32 to vector<128x64xf32>
    %15 = arith.mulf %14, %13 : vector<128x64xf32>
    %16 = arith.maximumf %13, %15 : vector<128x64xf32>
    %c0_8 = arith.constant 0 : index
    %c0_9 = arith.constant 0 : index
    %17 = vector.load %arg4[%c0_8, %c0_9] : memref<128x128xf32, #tpu.memory_space<vmem>>, vector<128x128xf32>
    %cst_10 = arith.constant dense<0.000000e+00> : vector<128x64xf32>
    %18 = tpu.matmul %17, %16, %cst_10 {dimension_numbers = #tpu.dot_dimension_numbers<[1], [0], [0], [1], [0, 0, 1, 1], [], []>} : vector<128x128xf32>, vector<128x64xf32>, vector<128x64xf32> -> vector<128x64xf32>
    %c0_11 = arith.constant 0 : index
    %c0_12 = arith.constant 0 : index
    %19 = vector.load %arg5[%c0_11, %c0_12] : memref<128x1xf32, #tpu.memory_space<vmem>>, vector<128x1xf32>
    %20 = vector.broadcast %19 : vector<128x1xf32> to vector<128x64xf32>
    %21 = arith.addf %18, %20 : vector<128x64xf32>
    %cst_13 = arith.constant 2.000000e-01 : f32
    %22 = vector.broadcast %cst_13 : f32 to vector<128x64xf32>
    %23 = arith.mulf %22, %21 : vector<128x64xf32>
    %24 = arith.maximumf %21, %23 : vector<128x64xf32>
    %c0_14 = arith.constant 0 : index
    %c0_15 = arith.constant 0 : index
    %25 = vector.load %arg6[%c0_14, %c0_15] : memref<128x1xf32, #tpu.memory_space<vmem>>, vector<128x1xf32>
    %26 = vector.broadcast %25 : vector<128x1xf32> to vector<128x64xf32>
    %27 = arith.mulf %24, %26 : vector<128x64xf32>
    %cst_16 = arith.constant dense<0.000000e+00> : vector<64xf32>
    %28 = vector.multi_reduction <add>, %27, %cst_16 [0] : vector<128x64xf32> to vector<64xf32>
    %29 = vector.shape_cast %28 : vector<64xf32> to vector<1x64xf32>
    %c0_17 = arith.constant 0 : index
    %c0_18 = arith.constant 0 : index
    %30 = vector.load %arg7[%c0_17, %c0_18] : memref<1x1xf32, #tpu.memory_space<vmem>>, vector<1x1xf32>
    %31 = vector.broadcast %30 : vector<1x1xf32> to vector<1x64xf32>
    %32 = arith.addf %29, %31 : vector<1x64xf32>
    %c0_19 = arith.constant 0 : index
    %c0_20 = arith.constant 0 : index
    %33 = vector.load %arg8[%c0_19, %c0_20] : memref<1x64xf32, #tpu.memory_space<vmem>>, vector<1x64xf32>
    tpu.vector_store %arg8[%c0_19, %c0_20], %32 {strides = array<i32>} : memref<1x64xf32, #tpu.memory_space<vmem>>, vector<1x64xf32>,
    return
  }
  func.func @transform_0(%arg0: i32) -> (i32, i32) {
    %c0_i32 = arith.constant 0 : i32
    %c0_i32_0 = arith.constant 0 : i32
    return %c0_i32, %arg0 : i32, i32
  }
  func.func @transform_1(%arg0: i32) -> (i32, i32) {
    %c0_i32 = arith.constant 0 : i32
    %c0_i32_0 = arith.constant 0 : i32
    %c0_i32_1 = arith.constant 0 : i32
    return %c0_i32, %c0_i32_0 : i32, i32
  }
  func.func @transform_2(%arg0: i32) -> (i32, i32) {
    %c0_i32 = arith.constant 0 : i32
    %c0_i32_0 = arith.constant 0 : i32
    %c0_i32_1 = arith.constant 0 : i32
    return %c0_i32, %c0_i32_0 : i32, i32
  }
  func.func @transform_3(%arg0: i32) -> (i32, i32) {
    %c0_i32 = arith.constant 0 : i32
    %c0_i32_0 = arith.constant 0 : i32
    %c0_i32_1 = arith.constant 0 : i32
    return %c0_i32, %c0_i32_0 : i32, i32
  }
  func.func @transform_4(%arg0: i32) -> (i32, i32) {
    %c0_i32 = arith.constant 0 : i32
    %c0_i32_0 = arith.constant 0 : i32
    %c0_i32_1 = arith.constant 0 : i32
    return %c0_i32, %c0_i32_0 : i32, i32
  }
  func.func @transform_5(%arg0: i32) -> (i32, i32) {
    %c0_i32 = arith.constant 0 : i32
    %c0_i32_0 = arith.constant 0 : i32
    %c0_i32_1 = arith.constant 0 : i32
    return %c0_i32, %c0_i32_0 : i32, i32
  }
  func.func @transform_6(%arg0: i32) -> (i32, i32) {
    %c0_i32 = arith.constant 0 : i32
    %c0_i32_0 = arith.constant 0 : i32
    %c0_i32_1 = arith.constant 0 : i32
    return %c0_i32, %c0_i32_0 : i32, i32
  }
  func.func @transform_7(%arg0: i32) -> (i32, i32) {
    %c0_i32 = arith.constant 0 : i32
    %c0_i32_0 = arith.constant 0 : i32
    return %c0_i32, %arg0 : i32, i32
  }
}

</mosaic_0001>

<llo_original>
// kernel: discriminator_forward.1
$region0: #{discriminator_forward.1}
  #allocation0 [shape = 'u32[]', space=smem, size = 0x4, offset = 0x4, fixed_abs, tag = 'smem constant byte address 0x4 - core index']
  #allocation1 [shape = 'u32[72,128]{1,0:T(1,128)}', space=vmem, size = 0x9000, scoped, tag = 'internal scratch']
  #allocation2 [shape = 'f32[1,1]{1,0:T(1,128)S(1)}', space=vmem, size = 0x200, scoped, tag = 'scoped memory for discriminator_forward.1']
  %s0 = inlined_call_operand.vmem [shape: f32[2,64], index: 0, kind: input, shape index: {}]
  %s1 = inlined_call_operand.vmem [shape: f32[128,2], index: 1, kind: input, shape index: {}]
  %s2 = inlined_call_operand.vmem [shape: f32[128,1], index: 2, kind: input, shape index: {}]
  %s3 = inlined_call_operand.vmem [shape: f32[128,128], index: 3, kind: input, shape index: {}]
  %s4 = inlined_call_operand.vmem [shape: f32[128,1], index: 4, kind: input, shape index: {}]
  %s5 = inlined_call_operand.vmem [shape: f32[128,1], index: 5, kind: input, shape index: {}]
  %s6 = inlined_call_operand.<no memory space> [shape: f32[1,1], index: 6, kind: input, shape index: {}]
  %s7 = inlined_call_operand.hbm [shape: f32[1,64], index: 7, kind: output, shape index: {}]
  %s8 = sld [smem:[#allocation0]]
  $region38: #{discriminator_forward.1} parent=0
    _
  %s10 = ssub.s32 1, %s8
  %s11 = scalar_select 0, %s10, %s8
  %v12 = vstv %s6
  %13 = vst [vmem:[#allocation2] sm:$0x1] %v12
  $region1: #{discriminator_forward.1} parent=0
    #allocation3 [shape = 'u8[512]{0}', space=vmem, size = 0x400, scoped, tag = 'output window, operand 0, single buffered']
    #allocation4 [shape = 's32[1]{0}', space=sflag, size = 0x4, scoped, tag = 'scoped memory for discriminator_forward.1']
    %14 = vsyncpa [#allocation4], 0
    // Predicated region
    $region2: #{discriminator_forward.1} parent=1 // pred_check
      _
    $region3: #{discriminator_forward.1} parent=1 // pred_check_branch
      %16 = sbr.rel (0) target = $region5
    $region4: #{discriminator_forward.1} parent=1 // pred_region
      _
    $region5: #{discriminator_forward.1} parent=1 // pred_fallthru
      _
    // Predicated region
    $region6: #{discriminator_forward.1} parent=1 // pred_check
      _
    $region7: #{discriminator_forward.1} parent=1 // pred_check_branch
      %18 = sbr.rel (0) target = $region9
    $region8: #{discriminator_forward.1} parent=1 // pred_region
      _
    $region9: #{discriminator_forward.1} parent=1 // pred_fallthru
      _
    // Predicated region
    $region10: #{discriminator_forward.1} parent=1 // pred_check
      _
    $region11: #{discriminator_forward.1} parent=1 // pred_check_branch
      %20 = sbr.rel (0) target = $region13
    $region12: #{discriminator_forward.1} parent=1 // pred_region
      _
    $region13: #{discriminator_forward.1} parent=1 // pred_fallthru
      _
    // Predicated region
    $region14: #{discriminator_forward.1} parent=1 // pred_check
      _
    $region15: #{discriminator_forward.1} parent=1 // pred_check_branch
      %22 = sbr.rel (0) target = $region17
    $region16: #{discriminator_forward.1} parent=1 // pred_region
      _
    $region17: #{discriminator_forward.1} parent=1 // pred_fallthru
      _
    // Predicated region
    $region18: #{discriminator_forward.1} parent=1 // pred_check
      _
    $region19: #{discriminator_forward.1} parent=1 // pred_check_branch
      %24 = sbr.rel (0) target = $region21
    $region20: #{discriminator_forward.1} parent=1 // pred_region
      _
    $region21: #{discriminator_forward.1} parent=1 // pred_fallthru
      _
    // Predicated region
    $region22: #{discriminator_forward.1} parent=1 // pred_check
      _
    $region23: #{discriminator_forward.1} parent=1 // pred_check_branch
      %26 = sbr.rel (0) target = $region25
    $region24: #{discriminator_forward.1} parent=1 // pred_region
      _
    $region25: #{discriminator_forward.1} parent=1 // pred_fallthru
      _
    // Predicated region
    $region26: #{discriminator_forward.1} parent=1 // pred_check
      _
    $region27: #{discriminator_forward.1} parent=1 // pred_check_branch
      %28 = sbr.rel (0) target = $region29
    $region28: #{discriminator_forward.1} parent=1 // pred_region
      _
    $region29: #{discriminator_forward.1} parent=1 // pred_fallthru
      _
    %v29 = vld [vmem:[%s0] sm:$0x1]
    %v30 = vld [vmem:[%s0 + $0x1] sm:$0x1]
    %v31 = vld [vmem:[%s1] sm:$0xff]
    %v32 = vld [vmem:[%s1 + $0x8] sm:$0xff]
    %v33 = vld [vmem:[%s1 + $0x10] sm:$0xff]
    %v34 = vld [vmem:[%s1 + $0x18] sm:$0xff]
    %v35 = vld [vmem:[%s1 + $0x20] sm:$0xff]
    %v36 = vld [vmem:[%s1 + $0x28] sm:$0xff]
    %v37 = vld [vmem:[%s1 + $0x30] sm:$0xff]
    %v38 = vld [vmem:[%s1 + $0x38] sm:$0xff]
    %v39 = vld [vmem:[%s1 + $0x40] sm:$0xff]
    %v40 = vld [vmem:[%s1 + $0x48] sm:$0xff]
    %v41 = vld [vmem:[%s1 + $0x50] sm:$0xff]
    %v42 = vld [vmem:[%s1 + $0x58] sm:$0xff]
    %v43 = vld [vmem:[%s1 + $0x60] sm:$0xff]
    %v44 = vld [vmem:[%s1 + $0x68] sm:$0xff]
    %v45 = vld [vmem:[%s1 + $0x70] sm:$0xff]
    %v46 = vld [vmem:[%s1 + $0x78] sm:$0xff]
    %48 = vset.pattern.permute.xlu0 0
    %49 = vperm.xlu0 %48, %v31
    %v50 = vpop.permute.xlu0 %49
    %53 = vset.pattern.permute.xlu0 0
    %54 = vperm.xlu0 %53, %v32
    %v55 = vpop.permute.xlu0 %54
    %58 = vset.pattern.permute.xlu0 0
    %59 = vperm.xlu0 %58, %v33
    %v60 = vpop.permute.xlu0 %59
    %63 = vset.pattern.permute.xlu0 0
    %64 = vperm.xlu0 %63, %v34
    %v65 = vpop.permute.xlu0 %64
    %68 = vset.pattern.permute.xlu0 0
    %69 = vperm.xlu0 %68, %v35
    %v70 = vpop.permute.xlu0 %69
    %73 = vset.pattern.permute.xlu0 0
    %74 = vperm.xlu0 %73, %v36
    %v75 = vpop.permute.xlu0 %74
    %78 = vset.pattern.permute.xlu0 0
    %79 = vperm.xlu0 %78, %v37
    %v80 = vpop.permute.xlu0 %79
    %83 = vset.pattern.permute.xlu0 0
    %84 = vperm.xlu0 %83, %v38
    %v85 = vpop.permute.xlu0 %84
    %88 = vset.pattern.permute.xlu0 0
    %89 = vperm.xlu0 %88, %v39
    %v90 = vpop.permute.xlu0 %89
    %93 = vset.pattern.permute.xlu0 0
    %94 = vperm.xlu0 %93, %v40
    %v95 = vpop.permute.xlu0 %94
    %98 = vset.pattern.permute.xlu0 0
    %99 = vperm.xlu0 %98, %v41
    %v100 = vpop.permute.xlu0 %99
    %103 = vset.pattern.permute.xlu0 0
    %104 = vperm.xlu0 %103, %v42
    %v105 = vpop.permute.xlu0 %104
    %108 = vset.pattern.permute.xlu0 0
    %109 = vperm.xlu0 %108, %v43
    %v110 = vpop.permute.xlu0 %109
    %113 = vset.pattern.permute.xlu0 0
    %114 = vperm.xlu0 %113, %v44
    %v115 = vpop.permute.xlu0 %114
    %118 = vset.pattern.permute.xlu0 0
    %119 = vperm.xlu0 %118, %v45
    %v120 = vpop.permute.xlu0 %119
    %123 = vset.pattern.permute.xlu0 0
    %124 = vperm.xlu0 %123, %v46
    %v125 = vpop.permute.xlu0 %124
    %v127 = vperm.slane %v29, 0
    %v128 = vmul.f32 %v50, %v127
    %v129 = vmul.f32 %v55, %v127
    %v130 = vmul.f32 %v60, %v127
    %v131 = vmul.f32 %v65, %v127
    %v132 = vmul.f32 %v70, %v127
    %v133 = vmul.f32 %v75, %v127
    %v134 = vmul.f32 %v80, %v127
    %v135 = vmul.f32 %v85, %v127
    %v136 = vmul.f32 %v90, %v127
    %v137 = vmul.f32 %v95, %v127
    %v138 = vmul.f32 %v100, %v127
    %v139 = vmul.f32 %v105, %v127
    %v140 = vmul.f32 %v110, %v127
    %v141 = vmul.f32 %v115, %v127
    %v142 = vmul.f32 %v120, %v127
    %v143 = vmul.f32 %v125, %v127
    %144 = vset.pattern.permute.xlu0 1
    %145 = vperm.xlu0 %144, %v31
    %v146 = vpop.permute.xlu0 %145
    %148 = vset.pattern.permute.xlu0 1
    %149 = vperm.xlu0 %148, %v32
    %v150 = vpop.permute.xlu0 %149
    %152 = vset.pattern.permute.xlu0 1
    %153 = vperm.xlu0 %152, %v33
    %v154 = vpop.permute.xlu0 %153
    %156 = vset.pattern.permute.xlu0 1
    %157 = vperm.xlu0 %156, %v34
    %v158 = vpop.permute.xlu0 %157
    %160 = vset.pattern.permute.xlu0 1
    %161 = vperm.xlu0 %160, %v35
    %v162 = vpop.permute.xlu0 %161
    %164 = vset.pattern.permute.xlu0 1
    %165 = vperm.xlu0 %164, %v36
    %v166 = vpop.permute.xlu0 %165
    %168 = vset.pattern.permute.xlu0 1
    %169 = vperm.xlu0 %168, %v37
    %v170 = vpop.permute.xlu0 %169
    %172 = vset.pattern.permute.xlu0 1
    %173 = vperm.xlu0 %172, %v38
    %v174 = vpop.permute.xlu0 %173
    %176 = vset.pattern.permute.xlu0 1
    %177 = vperm.xlu0 %176, %v39
    %v178 = vpop.permute.xlu0 %177
    %180 = vset.pattern.permute.xlu0 1
    %181 = vperm.xlu0 %180, %v40
    %v182 = vpop.permute.xlu0 %181
    %184 = vset.pattern.permute.xlu0 1
    %185 = vperm.xlu0 %184, %v41
    %v186 = vpop.permute.xlu0 %185
    %188 = vset.pattern.permute.xlu0 1
    %189 = vperm.xlu0 %188, %v42
    %v190 = vpop.permute.xlu0 %189
    %192 = vset.pattern.permute.xlu0 1
    %193 = vperm.xlu0 %192, %v43
    %v194 = vpop.permute.xlu0 %193
    %196 = vset.pattern.permute.xlu0 1
    %197 = vperm.xlu0 %196, %v44
    %v198 = vpop.permute.xlu0 %197
    %200 = vset.pattern.permute.xlu0 1
    %201 = vperm.xlu0 %200, %v45
    %v202 = vpop.permute.xlu0 %201
    %204 = vset.pattern.permute.xlu0 1
    %205 = vperm.xlu0 %204, %v46
    %v206 = vpop.permute.xlu0 %205
    %v208 = vperm.slane %v30, 0
    %v209 = vmul.f32 %v146, %v208
    %v210 = vmul.f32 %v150, %v208
    %v211 = vmul.f32 %v154, %v208
    %v212 = vmul.f32 %v158, %v208
    %v213 = vmul.f32 %v162, %v208
    %v214 = vmul.f32 %v166, %v208
    %v215 = vmul.f32 %v170, %v208
    %v216 = vmul.f32 %v174, %v208
    %v217 = vmul.f32 %v178, %v208
    %v218 = vmul.f32 %v182, %v208
    %v219 = vmul.f32 %v186, %v208
    %v220 = vmul.f32 %v190, %v208
    %v221 = vmul.f32 %v194, %v208
    %v222 = vmul.f32 %v198, %v208
    %v223 = vmul.f32 %v202, %v208
    %v224 = vmul.f32 %v206, %v208
    %v225 = vadd.f32 %v128, %v209
    %v226 = vadd.f32 %v129, %v210
    %v227 = vadd.f32 %v130, %v211
    %v228 = vadd.f32 %v131, %v212
    %v229 = vadd.f32 %v132, %v213
    %v230 = vadd.f32 %v133, %v214
    %v231 = vadd.f32 %v134, %v215
    %v232 = vadd.f32 %v135, %v216
    %v233 = vadd.f32 %v136, %v217
    %v234 = vadd.f32 %v137, %v218
    %v235 = vadd.f32 %v138, %v219
    %v236 = vadd.f32 %v139, %v220
    %v237 = vadd.f32 %v140, %v221
    %v238 = vadd.f32 %v141, %v222
    %v239 = vadd.f32 %v142, %v223
    %v240 = vadd.f32 %v143, %v224
    %v241 = vld [vmem:[%s2] sm:$0xff]
    %v242 = vld [vmem:[%s2 + $0x8] sm:$0xff]
    %v243 = vld [vmem:[%s2 + $0x10] sm:$0xff]
    %v244 = vld [vmem:[%s2 + $0x18] sm:$0xff]
    %v245 = vld [vmem:[%s2 + $0x20] sm:$0xff]
    %v246 = vld [vmem:[%s2 + $0x28] sm:$0xff]
    %v247 = vld [vmem:[%s2 + $0x30] sm:$0xff]
    %v248 = vld [vmem:[%s2 + $0x38] sm:$0xff]
    %v249 = vld [vmem:[%s2 + $0x40] sm:$0xff]
    %v250 = vld [vmem:[%s2 + $0x48] sm:$0xff]
    %v251 = vld [vmem:[%s2 + $0x50] sm:$0xff]
    %v252 = vld [vmem:[%s2 + $0x58] sm:$0xff]
    %v253 = vld [vmem:[%s2 + $0x60] sm:$0xff]
    %v254 = vld [vmem:[%s2 + $0x68] sm:$0xff]
    %v255 = vld [vmem:[%s2 + $0x70] sm:$0xff]
    %v256 = vld [vmem:[%s2 + $0x78] sm:$0xff]
    %258 = vset.pattern.permute.xlu0 0
    %259 = vperm.xlu0 %258, %v241
    %v260 = vpop.permute.xlu0 %259
    %263 = vset.pattern.permute.xlu0 0
    %264 = vperm.xlu0 %263, %v242
    %v265 = vpop.permute.xlu0 %264
    %268 = vset.pattern.permute.xlu0 0
    %269 = vperm.xlu0 %268, %v243
    %v270 = vpop.permute.xlu0 %269
    %273 = vset.pattern.permute.xlu0 0
    %274 = vperm.xlu0 %273, %v244
    %v275 = vpop.permute.xlu0 %274
    %278 = vset.pattern.permute.xlu0 0
    %279 = vperm.xlu0 %278, %v245
    %v280 = vpop.permute.xlu0 %279
    %283 = vset.pattern.permute.xlu0 0
    %284 = vperm.xlu0 %283, %v246
    %v285 = vpop.permute.xlu0 %284
    %288 = vset.pattern.permute.xlu0 0
    %289 = vperm.xlu0 %288, %v247
    %v290 = vpop.permute.xlu0 %289
    %293 = vset.pattern.permute.xlu0 0
    %294 = vperm.xlu0 %293, %v248
    %v295 = vpop.permute.xlu0 %294
    %298 = vset.pattern.permute.xlu0 0
    %299 = vperm.xlu0 %298, %v249
    %v300 = vpop.permute.xlu0 %299
    %303 = vset.pattern.permute.xlu0 0
    %304 = vperm.xlu0 %303, %v250
    %v305 = vpop.permute.xlu0 %304
    %308 = vset.pattern.permute.xlu0 0
    %309 = vperm.xlu0 %308, %v251
    %v310 = vpop.permute.xlu0 %309
    %313 = vset.pattern.permute.xlu0 0
    %314 = vperm.xlu0 %313, %v252
    %v315 = vpop.permute.xlu0 %314
    %318 = vset.pattern.permute.xlu0 0
    %319 = vperm.xlu0 %318, %v253
    %v320 = vpop.permute.xlu0 %319
    %323 = vset.pattern.permute.xlu0 0
    %324 = vperm.xlu0 %323, %v254
    %v325 = vpop.permute.xlu0 %324
    %328 = vset.pattern.permute.xlu0 0
    %329 = vperm.xlu0 %328, %v255
    %v330 = vpop.permute.xlu0 %329
    %333 = vset.pattern.permute.xlu0 0
    %334 = vperm.xlu0 %333, %v256
    %v335 = vpop.permute.xlu0 %334
    %v337 = vadd.f32 %v225, %v260
    %v338 = vadd.f32 %v226, %v265
    %v339 = vadd.f32 %v227, %v270
    %v340 = vadd.f32 %v228, %v275
    %v341 = vadd.f32 %v229, %v280
    %v342 = vadd.f32 %v230, %v285
    %v343 = vadd.f32 %v231, %v290
    %v344 = vadd.f32 %v232, %v295
    %v345 = vadd.f32 %v233, %v300
    %v346 = vadd.f32 %v234, %v305
    %v347 = vadd.f32 %v235, %v310
    %v348 = vadd.f32 %v236, %v315
    %v349 = vadd.f32 %v237, %v320
    %v350 = vadd.f32 %v238, %v325
    %v351 = vadd.f32 %v239, %v330
    %v352 = vadd.f32 %v240, %v335
    %v353 = vmul.f32 %v337, 0.2
    %v354 = vmul.f32 %v338, 0.2
    %v355 = vmul.f32 %v339, 0.2
    %v356 = vmul.f32 %v340, 0.2
    %v357 = vmul.f32 %v341, 0.2
    %v358 = vmul.f32 %v342, 0.2
    %v359 = vmul.f32 %v343, 0.2
    %v360 = vmul.f32 %v344, 0.2
    %v361 = vmul.f32 %v345, 0.2
    %v362 = vmul.f32 %v346, 0.2
    %v363 = vmul.f32 %v347, 0.2
    %v364 = vmul.f32 %v348, 0.2
    %v365 = vmul.f32 %v349, 0.2
    %v366 = vmul.f32 %v350, 0.2
    %v367 = vmul.f32 %v351, 0.2
    %v368 = vmul.f32 %v352, 0.2
    %v369 = vmax.f32 %v337, %v353
    %v370 = vmax.f32 %v338, %v354
    %v371 = vmax.f32 %v339, %v355
    %v372 = vmax.f32 %v340, %v356
    %v373 = vmax.f32 %v341, %v357
    %v374 = vmax.f32 %v342, %v358
    %v375 = vmax.f32 %v343, %v359
    %v376 = vmax.f32 %v344, %v360
    %v377 = vmax.f32 %v345, %v361
    %v378 = vmax.f32 %v346, %v362
    %v379 = vmax.f32 %v347, %v363
    %v380 = vmax.f32 %v348, %v364
    %v381 = vmax.f32 %v349, %v365
    %v382 = vmax.f32 %v350, %v366
    %v383 = vmax.f32 %v351, %v367
    %v384 = vmax.f32 %v352, %v368
    %v385 = vld [vmem:[%s3] sm:$0xff]
    %v386 = vld [vmem:[%s3 + $0x8] sm:$0xff]
    %v387 = vld [vmem:[%s3 + $0x10] sm:$0xff]
    %v388 = vld [vmem:[%s3 + $0x18] sm:$0xff]
    %v389 = vld [vmem:[%s3 + $0x20] sm:$0xff]
    %v390 = vld [vmem:[%s3 + $0x28] sm:$0xff]
    %v391 = vld [vmem:[%s3 + $0x30] sm:$0xff]
    %v392 = vld [vmem:[%s3 + $0x38] sm:$0xff]
    %v393 = vld [vmem:[%s3 + $0x40] sm:$0xff]
    %v394 = vld [vmem:[%s3 + $0x48] sm:$0xff]
    %v395 = vld [vmem:[%s3 + $0x50] sm:$0xff]
    %v396 = vld [vmem:[%s3 + $0x58] sm:$0xff]
    %v397 = vld [vmem:[%s3 + $0x60] sm:$0xff]
    %v398 = vld [vmem:[%s3 + $0x68] sm:$0xff]
    %v399 = vld [vmem:[%s3 + $0x70] sm:$0xff]
    %v400 = vld [vmem:[%s3 + $0x78] sm:$0xff]
    %v401 = vld [vmem:[%s4] sm:$0xff]
    %v402 = vld [vmem:[%s4 + $0x8] sm:$0xff]
    %v403 = vld [vmem:[%s4 + $0x10] sm:$0xff]
    %v404 = vld [vmem:[%s4 + $0x18] sm:$0xff]
    %v405 = vld [vmem:[%s4 + $0x20] sm:$0xff]
    %v406 = vld [vmem:[%s4 + $0x28] sm:$0xff]
    %v407 = vld [vmem:[%s4 + $0x30] sm:$0xff]
    %v408 = vld [vmem:[%s4 + $0x38] sm:$0xff]
    %v409 = vld [vmem:[%s4 + $0x40] sm:$0xff]
    %v410 = vld [vmem:[%s4 + $0x48] sm:$0xff]
    %v411 = vld [vmem:[%s4 + $0x50] sm:$0xff]
    %v412 = vld [vmem:[%s4 + $0x58] sm:$0xff]
    %v413 = vld [vmem:[%s4 + $0x60] sm:$0xff]
    %v414 = vld [vmem:[%s4 + $0x68] sm:$0xff]
    %v415 = vld [vmem:[%s4 + $0x70] sm:$0xff]
    %v416 = vld [vmem:[%s4 + $0x78] sm:$0xff]
    %418 = vset.pattern.permute.xlu0 0
    %419 = vperm.xlu0 %418, %v401
    %v420 = vpop.permute.xlu0 %419
    %423 = vset.pattern.permute.xlu0 0
    %424 = vperm.xlu0 %423, %v402
    %v425 = vpop.permute.xlu0 %424
    %428 = vset.pattern.permute.xlu0 0
    %429 = vperm.xlu0 %428, %v403
    %v430 = vpop.permute.xlu0 %429
    %433 = vset.pattern.permute.xlu0 0
    %434 = vperm.xlu0 %433, %v404
    %v435 = vpop.permute.xlu0 %434
    %438 = vset.pattern.permute.xlu0 0
    %439 = vperm.xlu0 %438, %v405
    %v440 = vpop.permute.xlu0 %439
    %443 = vset.pattern.permute.xlu0 0
    %444 = vperm.xlu0 %443, %v406
    %v445 = vpop.permute.xlu0 %444
    %448 = vset.pattern.permute.xlu0 0
    %449 = vperm.xlu0 %448, %v407
    %v450 = vpop.permute.xlu0 %449
    %453 = vset.pattern.permute.xlu0 0
    %454 = vperm.xlu0 %453, %v408
    %v455 = vpop.permute.xlu0 %454
    %458 = vset.pattern.permute.xlu0 0
    %459 = vperm.xlu0 %458, %v409
    %v460 = vpop.permute.xlu0 %459
    %463 = vset.pattern.permute.xlu0 0
    %464 = vperm.xlu0 %463, %v410
    %v465 = vpop.permute.xlu0 %464
    %468 = vset.pattern.permute.xlu0 0
    %469 = vperm.xlu0 %468, %v411
    %v470 = vpop.permute.xlu0 %469
    %473 = vset.pattern.permute.xlu0 0
    %474 = vperm.xlu0 %473, %v412
    %v475 = vpop.permute.xlu0 %474
    %478 = vset.pattern.permute.xlu0 0
    %479 = vperm.xlu0 %478, %v413
    %v480 = vpop.permute.xlu0 %479
    %483 = vset.pattern.permute.xlu0 0
    %484 = vperm.xlu0 %483, %v414
    %v485 = vpop.permute.xlu0 %484
    %488 = vset.pattern.permute.xlu0 0
    %489 = vperm.xlu0 %488, %v415
    %v490 = vpop.permute.xlu0 %489
    %493 = vset.pattern.permute.xlu0 0
    %494 = vperm.xlu0 %493, %v416
    %v495 = vpop.permute.xlu0 %494
    %497 = vmatpush.msra.mxu0 %v384
    %498 = vmatpush.msra.mxu0 %v383
    %499 = vmatpush.msra.mxu0 %v382
    %500 = vmatpush.msra.mxu0 %v381
    %501 = vmatpush.msra.mxu0 %v380
    %502 = vmatpush.msra.mxu0 %v379
    %503 = vmatpush.msra.mxu0 %v378
    %504 = vmatpush.msra.mxu0 %v377
    %505 = vmatpush.msra.mxu0 %v376
    %506 = vmatpush.msra.mxu0 %v375
    %507 = vmatpush.msra.mxu0 %v374
    %508 = vmatpush.msra.mxu0 %v373
    %509 = vmatpush.msra.mxu0 %v372
    %510 = vmatpush.msra.mxu0 %v371
    %511 = vmatpush.msra.mxu0 %v370
    %512 = vmatpush.msra.mxu0 %v369
    %513 = vmatmul.f32.gmra.mxu0 %v385
    %v514 = vpop.f32.mrf.mxu0
    %v515 = vadd.f32 %v420, %v514
    %516 = vmatmul.f32.gmra.mxu0 %v386
    %v517 = vpop.f32.mrf.mxu0
    %v518 = vadd.f32 %v425, %v517
    %519 = vmatmul.f32.gmra.mxu0 %v387
    %v520 = vpop.f32.mrf.mxu0
    %v521 = vadd.f32 %v430, %v520
    %522 = vmatmul.f32.gmra.mxu0 %v388
    %v523 = vpop.f32.mrf.mxu0
    %v524 = vadd.f32 %v435, %v523
    %525 = vmatmul.f32.gmra.mxu0 %v389
    %v526 = vpop.f32.mrf.mxu0
    %v527 = vadd.f32 %v440, %v526
    %528 = vmatmul.f32.gmra.mxu0 %v390
    %v529 = vpop.f32.mrf.mxu0
    %v530 = vadd.f32 %v445, %v529
    %531 = vmatmul.f32.gmra.mxu0 %v391
    %v532 = vpop.f32.mrf.mxu0
    %v533 = vadd.f32 %v450, %v532
    %534 = vmatmul.f32.gmra.mxu0 %v392
    %v535 = vpop.f32.mrf.mxu0
    %v536 = vadd.f32 %v455, %v535
    %537 = vmatmul.f32.gmra.mxu0 %v393
    %v538 = vpop.f32.mrf.mxu0
    %v539 = vadd.f32 %v460, %v538
    %540 = vmatmul.f32.gmra.mxu0 %v394
    %v541 = vpop.f32.mrf.mxu0
    %v542 = vadd.f32 %v465, %v541
    %543 = vmatmul.f32.gmra.mxu0 %v395
    %v544 = vpop.f32.mrf.mxu0
    %v545 = vadd.f32 %v470, %v544
    %546 = vmatmul.f32.gmra.mxu0 %v396
    %v547 = vpop.f32.mrf.mxu0
    %v548 = vadd.f32 %v475, %v547
    %549 = vmatmul.f32.gmra.mxu0 %v397
    %v550 = vpop.f32.mrf.mxu0
    %v551 = vadd.f32 %v480, %v550
    %552 = vmatmul.f32.gmra.mxu0 %v398
    %v553 = vpop.f32.mrf.mxu0
    %v554 = vadd.f32 %v485, %v553
    %555 = vmatmul.f32.gmra.mxu0 %v399
    %v556 = vpop.f32.mrf.mxu0
    %v557 = vadd.f32 %v490, %v556
    %558 = vmatmul.f32.gmra.mxu0 %v400
    %v559 = vpop.f32.mrf.mxu0
    %v560 = vadd.f32 %v495, %v559
    %561 = vdwg.mxu0
    %v562 = vmul.f32 %v515, 0.2
    %v563 = vmul.f32 %v518, 0.2
    %v564 = vmul.f32 %v521, 0.2
    %v565 = vmul.f32 %v524, 0.2
    %v566 = vmul.f32 %v527, 0.2
    %v567 = vmul.f32 %v530, 0.2
    %v568 = vmul.f32 %v533, 0.2
    %v569 = vmul.f32 %v536, 0.2
    %v570 = vmul.f32 %v539, 0.2
    %v571 = vmul.f32 %v542, 0.2
    %v572 = vmul.f32 %v545, 0.2
    %v573 = vmul.f32 %v548, 0.2
    %v574 = vmul.f32 %v551, 0.2
    %v575 = vmul.f32 %v554, 0.2
    %v576 = vmul.f32 %v557, 0.2
    %v577 = vmul.f32 %v560, 0.2
    %v578 = vmax.f32 %v515, %v562
    %v579 = vmax.f32 %v518, %v563
    %v580 = vmax.f32 %v521, %v564
    %v581 = vmax.f32 %v524, %v565
    %v582 = vmax.f32 %v527, %v566
    %v583 = vmax.f32 %v530, %v567
    %v584 = vmax.f32 %v533, %v568
    %v585 = vmax.f32 %v536, %v569
    %v586 = vmax.f32 %v539, %v570
    %v587 = vmax.f32 %v542, %v571
    %v588 = vmax.f32 %v545, %v572
    %v589 = vmax.f32 %v548, %v573
    %v590 = vmax.f32 %v551, %v574
    %v591 = vmax.f32 %v554, %v575
    %v592 = vmax.f32 %v557, %v576
    %v593 = vmax.f32 %v560, %v577
    %v594 = vld [vmem:[%s5] sm:$0xff]
    %v595 = vld [vmem:[%s5 + $0x8] sm:$0xff]
    %v596 = vld [vmem:[%s5 + $0x10] sm:$0xff]
    %v597 = vld [vmem:[%s5 + $0x18] sm:$0xff]
    %v598 = vld [vmem:[%s5 + $0x20] sm:$0xff]
    %v599 = vld [vmem:[%s5 + $0x28] sm:$0xff]
    %v600 = vld [vmem:[%s5 + $0x30] sm:$0xff]
    %v601 = vld [vmem:[%s5 + $0x38] sm:$0xff]
    %v602 = vld [vmem:[%s5 + $0x40] sm:$0xff]
    %v603 = vld [vmem:[%s5 + $0x48] sm:$0xff]
    %v604 = vld [vmem:[%s5 + $0x50] sm:$0xff]
    %v605 = vld [vmem:[%s5 + $0x58] sm:$0xff]
    %v606 = vld [vmem:[%s5 + $0x60] sm:$0xff]
    %v607 = vld [vmem:[%s5 + $0x68] sm:$0xff]
    %v608 = vld [vmem:[%s5 + $0x70] sm:$0xff]
    %v609 = vld [vmem:[%s5 + $0x78] sm:$0xff]
    %611 = vset.pattern.permute.xlu0 0
    %612 = vperm.xlu0 %611, %v594
    %v613 = vpop.permute.xlu0 %612
    %616 = vset.pattern.permute.xlu0 0
    %617 = vperm.xlu0 %616, %v595
    %v618 = vpop.permute.xlu0 %617
    %621 = vset.pattern.permute.xlu0 0
    %622 = vperm.xlu0 %621, %v596
    %v623 = vpop.permute.xlu0 %622
    %626 = vset.pattern.permute.xlu0 0
    %627 = vperm.xlu0 %626, %v597
    %v628 = vpop.permute.xlu0 %627
    %631 = vset.pattern.permute.xlu0 0
    %632 = vperm.xlu0 %631, %v598
    %v633 = vpop.permute.xlu0 %632
    %636 = vset.pattern.permute.xlu0 0
    %637 = vperm.xlu0 %636, %v599
    %v638 = vpop.permute.xlu0 %637
    %641 = vset.pattern.permute.xlu0 0
    %642 = vperm.xlu0 %641, %v600
    %v643 = vpop.permute.xlu0 %642
    %646 = vset.pattern.permute.xlu0 0
    %647 = vperm.xlu0 %646, %v601
    %v648 = vpop.permute.xlu0 %647
    %651 = vset.pattern.permute.xlu0 0
    %652 = vperm.xlu0 %651, %v602
    %v653 = vpop.permute.xlu0 %652
    %656 = vset.pattern.permute.xlu0 0
    %657 = vperm.xlu0 %656, %v603
    %v658 = vpop.permute.xlu0 %657
    %661 = vset.pattern.permute.xlu0 0
    %662 = vperm.xlu0 %661, %v604
    %v663 = vpop.permute.xlu0 %662
    %666 = vset.pattern.permute.xlu0 0
    %667 = vperm.xlu0 %666, %v605
    %v668 = vpop.permute.xlu0 %667
    %671 = vset.pattern.permute.xlu0 0
    %672 = vperm.xlu0 %671, %v606
    %v673 = vpop.permute.xlu0 %672
    %676 = vset.pattern.permute.xlu0 0
    %677 = vperm.xlu0 %676, %v607
    %v678 = vpop.permute.xlu0 %677
    %681 = vset.pattern.permute.xlu0 0
    %682 = vperm.xlu0 %681, %v608
    %v683 = vpop.permute.xlu0 %682
    %686 = vset.pattern.permute.xlu0 0
    %687 = vperm.xlu0 %686, %v609
    %v688 = vpop.permute.xlu0 %687
    %v690 = vmul.f32 %v578, %v613
    %v691 = vmul.f32 %v579, %v618
    %v692 = vmul.f32 %v580, %v623
    %v693 = vmul.f32 %v581, %v628
    %v694 = vmul.f32 %v582, %v633
    %v695 = vmul.f32 %v583, %v638
    %v696 = vmul.f32 %v584, %v643
    %v697 = vmul.f32 %v585, %v648
    %v698 = vmul.f32 %v586, %v653
    %v699 = vmul.f32 %v587, %v658
    %v700 = vmul.f32 %v588, %v663
    %v701 = vmul.f32 %v589, %v668
    %v702 = vmul.f32 %v590, %v673
    %v703 = vmul.f32 %v591, %v678
    %v704 = vmul.f32 %v592, %v683
    %v705 = vmul.f32 %v593, %v688
    %vm706 = vcmask 523264
    %v707 = vsel %vm706, %v690, 0.0
    %v708 = vsel %vm706, %v691, 0.0
    %v709 = vadd.f32 %v707, %v708
    %v710 = vsel %vm706, %v692, 0.0
    %v711 = vadd.f32 %v709, %v710
    %v712 = vsel %vm706, %v693, 0.0
    %v713 = vadd.f32 %v711, %v712
    %v714 = vsel %vm706, %v694, 0.0
    %v715 = vadd.f32 %v713, %v714
    %v716 = vsel %vm706, %v695, 0.0
    %v717 = vadd.f32 %v715, %v716
    %v718 = vsel %vm706, %v696, 0.0
    %v719 = vadd.f32 %v717, %v718
    %v720 = vsel %vm706, %v697, 0.0
    %v721 = vadd.f32 %v719, %v720
    %v722 = vsel %vm706, %v698, 0.0
    %v723 = vadd.f32 %v721, %v722
    %v724 = vsel %vm706, %v699, 0.0
    %v725 = vadd.f32 %v723, %v724
    %v726 = vsel %vm706, %v700, 0.0
    %v727 = vadd.f32 %v725, %v726
    %v728 = vsel %vm706, %v701, 0.0
    %v729 = vadd.f32 %v727, %v728
    %v730 = vsel %vm706, %v702, 0.0
    %v731 = vadd.f32 %v729, %v730
    %v732 = vsel %vm706, %v703, 0.0
    %v733 = vadd.f32 %v731, %v732
    %v734 = vsel %vm706, %v704, 0.0
    %v735 = vadd.f32 %v733, %v734
    %v736 = vsel %vm706, %v705, 0.0
    %v737 = vadd.f32 %v735, %v736
    %v738 = vrot.slane %v737, 4
    %v739 = vadd.f32 %v737, %v738
    %v740 = vrot.slane %v739, 2
    %v741 = vadd.f32 %v739, %v740
    %v742 = vrot.slane %v741, 1
    %v743 = vadd.f32 %v741, %v742
    %v744 = vld [vmem:[#allocation2] sm:$0x1]
    %746 = vset.pattern.permute.xlu0 0
    %747 = vperm.xlu0 %746, %v744
    %v748 = vpop.permute.xlu0 %747
    %v750 = vperm.slane %v748, 0
    %v751 = vadd.f32 %v743, %v750
    %vm752 = vcmask 516096
    %753 = vst.msk [vmem:[#allocation3] sm:$0x1] %vm752, %v751
    // Predicated region
    $region30: #{discriminator_forward.1} parent=1 // pred_check
      _
    $region31: #{discriminator_forward.1} parent=1 // pred_check_branch
      %755 = sbr.rel (0) target = $region33
    $region32: #{discriminator_forward.1} parent=1 // pred_region
      %757 = vsyncadd [#allocation4], 0
      %s759 = sshll.u32 [#allocation3], 4
      %s760 = int_to_ptr.vmem [resolvable:$true] %s759
      %s761 = sshll.u32 %s7, 4
      %s762 = int_to_ptr.hbm [resolvable:$true] %s761
      %764 = dma.vmem_to_hbm [thread:$0]  %s760, 16, %s762, [#allocation4]
    $region33: #{discriminator_forward.1} parent=1 // pred_fallthru
      _
    // Predicated region
    $region34: #{discriminator_forward.1} parent=1 // pred_check
      _
    $region35: #{discriminator_forward.1} parent=1 // pred_check_branch
      %766 = sbr.rel (0) target = $region37
    $region36: #{discriminator_forward.1} parent=1 // pred_region
      %768 = dma.done [#allocation4], 16
    $region37: #{discriminator_forward.1} parent=1 // pred_fallthru
      _
    %769 = vsyncpa [#allocation4], 1

</llo_original>
